<compile_context>
chip_gen: v7x
topology: tpu7x:2x2x1
jax: 0.10.0
libtpu: 0.0.40
codegen_flags: <defaults>
</compile_context>

<pallas_src>
import jax
import jax.numpy as jnp
from jax.experimental import pallas as pl
from jax.experimental.pallas import tpu as pltpu
from typing import NamedTuple


def _round_up(x, m):
    return (x + m - 1) // m * m


def _cdiv(a, b):
    return (a + b - 1) // b


# ---------------------------------------------------------------------------
# Kernel
# ---------------------------------------------------------------------------
def mlp_kernel(x_ref, w1_ref, b1_ref, w2_ref, b2_ref, o_ref):
    """Fused Linear -> ReLU -> Linear on one (tm, D_in) activation tile.

    x is already in the MXU compute dtype (cast folded into the wrapper's
    padding copy).  Both matmuls accumulate in f32 on the MXU; the bias-add /
    ReLU epilogue runs in f32 on the VPU over lane-dense (multiple-of-128)
    rows, so all stores are full-width vst (no masked partial stores).
    """
    h = jnp.dot(x_ref[...], w1_ref[...], preferred_element_type=jnp.float32)
    h = jnp.maximum(h + b1_ref[...], 0.0)
    h = h.astype(w2_ref.dtype)           # repack for the 2nd MXU push (no-op for f32)
    out = jnp.dot(h, w2_ref[...], preferred_element_type=jnp.float32)
    o_ref[...] = (out + b2_ref[...]).astype(o_ref.dtype)


# ---------------------------------------------------------------------------
# Parameter preparation (hoisted out of the per-call hot path)
# ---------------------------------------------------------------------------
class MLPParams(NamedTuple):
    w1p: jax.Array   # [d_in_p, h_p]    compute dtype
    b1p: jax.Array   # [1, h_p]         f32
    w2p: jax.Array   # [h_p, d_out_p]   compute dtype
    b2p: jax.Array   # [1, d_out_p]     f32
    d_in: int
    d_out: int


def prepare_params(w1, b1, w2, b2, *, compute_dtype=jnp.bfloat16):
    """Pad feature dims to multiples of 128 and cast weights once.

    w1: [D_in, H], b1: [H], w2: [H, D_out], b2: [D_out]
    (weights are in [in, out] layout, i.e. nn.Linear.weight transposed).

    Zero padding preserves semantics: padded x columns hit zero w1 rows,
    padded hidden columns are ReLU(0 + 0) = 0 and hit zero w2 rows, padded
    output columns / batch rows are sliced away by the wrapper.
    """
    D_in, H = w1.shape
    D_out = w2.shape[1]
    d_in_p, h_p, d_out_p = (_round_up(d, 128) for d in (D_in, H, D_out))
    f32 = jnp.float32
    w1p = jnp.zeros((d_in_p, h_p), compute_dtype).at[:D_in, :H].set(
        w1.astype(compute_dtype))
    w2p = jnp.zeros((h_p, d_out_p), compute_dtype).at[:H, :D_out].set(
        w2.astype(compute_dtype))
    b1p = jnp.zeros((1, h_p), f32).at[0, :H].set(b1.astype(f32))
    b2p = jnp.zeros((1, d_out_p), f32).at[0, :D_out].set(b2.astype(f32))
    return MLPParams(w1p, b1p, w2p, b2p, D_in, D_out)


# ---------------------------------------------------------------------------
# VMEM budgeting
# ---------------------------------------------------------------------------
def _vmem_footprint_bytes(tm, d_in_p, h_p, d_out_p, compute_dtype, out_dtype,
                          weight_bufs):
    c = jnp.dtype(compute_dtype).itemsize
    o = jnp.dtype(out_dtype).itemsize
    x_stream = 2 * tm * d_in_p * c                      # double-buffered activations
    out_stream = 2 * tm * d_out_p * o                   # double-buffered outputs
    weights = weight_bufs * ((d_in_p * h_p + h_p * d_out_p) * c
                             + (h_p + d_out_p) * 4)     # resident weights + f32 biases
    live = tm * h_p * (4 + c) + tm * d_out_p * 4        # f32 hidden + repack + f32 out
    return x_stream + out_stream + weights + live


def _default_vmem_budget():
    # Conservative working budget that fits v7x's 64 MiB VMEM.  On v5e/v6e
    # (128 MiB) get_tpu_info lets us use a larger fraction for bigger tiles.
    try:
        cap = getattr(pltpu.get_tpu_info(), "vmem_capacity_bytes", None)
        if cap:
            return int(cap * 3 // 4)
    except Exception:
        pass
    return 48 * 1024 * 1024


# ---------------------------------------------------------------------------
# Forward wrapper
# ---------------------------------------------------------------------------
def mlp_forward(x, params: MLPParams, *, block_m=256, vmem_budget_bytes=None):
    """y = relu(x @ w1 + b1) @ w2 + b2, returned in x.dtype.

    x : [B, D_in].  Weights must come from prepare_params().  The batch dim is
    tiled over a 1-D "parallel" grid (megacore sharding on v7x, BlockSpec
    double-buffering of the activation stream everywhere); padded weights stay
    resident in VMEM across grid steps.
    """
    B, D_in = x.shape
    assert D_in == params.d_in, (D_in, params.d_in)
    d_in_p, h_p = params.w1p.shape
    d_out_p = params.w2p.shape[1]
    compute_dtype = params.w1p.dtype
    out_dtype = x.dtype

    if vmem_budget_bytes is None:
        vmem_budget_bytes = _default_vmem_budget()

    # ---- batch tile --------------------------------------------------------
    b8 = _round_up(B, 8)
    tm = max(8, min(_round_up(block_m, 8), b8))
    # Balance the tile across grid steps so a ragged batch doesn't pay up to
    # tm-1 rows of pure-padding matmul + writeback on the last step.
    tm = _round_up(_cdiv(b8, _cdiv(b8, tm)), 8)
    # Shrink tm until the footprint fits the VMEM budget (weights stay
    # resident; only the streamed/live activation tiles scale with tm).
    while tm > 8 and _vmem_footprint_bytes(
            tm, d_in_p, h_p, d_out_p, compute_dtype, out_dtype, 1) > vmem_budget_bytes:
        tm = max(8, _round_up(tm // 2, 8))
    # TODO(synk): add a D_in/H reduction-tiled path (trailing "arbitrary" grid
    # axis + f32 accumulator scratch) for layers whose resident weights alone
    # exceed the VMEM budget (hit first on v7x's 64 MiB).

    b_p = _round_up(B, tm)
    grid = (b_p // tm,)

    # ---- pad + pre-cast the activation stream (bf16 halves x DMA bytes) ----
    xp = jnp.zeros((b_p, d_in_p), compute_dtype).at[:B, :D_in].set(
        x.astype(compute_dtype))

    # Upper-bound footprint (covers the double-buffered-weights fallback too).
    footprint = _vmem_footprint_bytes(tm, d_in_p, h_p, d_out_p,
                                      compute_dtype, out_dtype, 2)
    vmem_limit = min(100 * 1024 * 1024,
                     max(16 * 1024 * 1024, int(footprint * 5 // 4) + (4 << 20)))

    bytes_accessed = (xp.size * xp.dtype.itemsize
                      + params.w1p.size * params.w1p.dtype.itemsize
                      + params.w2p.size * params.w2p.dtype.itemsize
                      + params.b1p.size * 4 + params.b2p.size * 4
                      + b_p * d_out_p * jnp.dtype(out_dtype).itemsize)
    cost = pl.CostEstimate(
        flops=2 * b_p * (d_in_p * h_p + h_p * d_out_p),
        transcendentals=0,
        bytes_accessed=bytes_accessed)

    def _make_call(single_buffer_weights):
        # Constant index_map -> weights/biases never re-fetched; single buffer
        # halves their VMEM when pipeline_mode is supported.
        w_kwargs = ({"pipeline_mode": pl.Buffered(1)}
                    if single_buffer_weights else {})
        return pl.pallas_call(
            mlp_kernel,
            out_shape=jax.ShapeDtypeStruct((b_p, d_out_p), out_dtype),
            grid_spec=pltpu.PrefetchScalarGridSpec(
                num_scalar_prefetch=0,
                grid=grid,
                in_specs=[
                    # activations: streamed / double-buffered over the batch grid
                    pl.BlockSpec((tm, d_in_p), lambda i: (i, 0)),
                    # weights & biases: resident in VMEM across grid steps
                    pl.BlockSpec((d_in_p, h_p), lambda i: (0, 0), **w_kwargs),
                    pl.BlockSpec((1, h_p), lambda i: (0, 0), **w_kwargs),
                    pl.BlockSpec((h_p, d_out_p), lambda i: (0, 0), **w_kwargs),
                    pl.BlockSpec((1, d_out_p), lambda i: (0, 0), **w_kwargs),
                ],
                out_specs=pl.BlockSpec((tm, d_out_p), lambda i: (i, 0)),
            ),
            compiler_params=pltpu.CompilerParams(
                dimension_semantics=("parallel",),
                vmem_limit_bytes=vmem_limit,
            ),
            cost_estimate=cost,
        )

    args = (xp, params.w1p, params.b1p, params.w2p, params.b2p)
    try:
        out_padded = _make_call(True)(*args)
    except Exception:
        # pipeline_mode=pl.Buffered(1) not supported on this jax version:
        # fall back to default (double-buffered) weight specs.
        out_padded = _make_call(False)(*args)

    return out_padded[:B, :params.d_out]


# ---------------------------------------------------------------------------
# Reference & init helpers
# ---------------------------------------------------------------------------
def ref_forward(x, w1, b1, w2, b2, compute_dtype):
    """Plain-JAX reference using the same operand dtype / f32 accumulation."""
    h = jnp.dot(x.astype(compute_dtype), w1.astype(compute_dtype),
                preferred_element_type=jnp.float32)
    h = jnp.maximum(h + b1.astype(jnp.float32), 0.0)
    out = jnp.dot(h.astype(compute_dtype), w2.astype(compute_dtype),
                  preferred_element_type=jnp.float32)
    return out + b2.astype(jnp.float32)


def orthogonal(key, shape, gain=1.0, dtype=jnp.float32):
    """Deterministic orthogonal init (matches semantics of torch orthogonal_)."""
    rows, cols = shape
    n = max(rows, cols)
    a = jax.random.normal(key, (n, n), dtype=jnp.float32)
    q, r = jnp.linalg.qr(a)
    q = q * jnp.sign(jnp.diag(r))  # sign fix, as torch does
    return (gain * q[:rows, :cols]).astype(dtype)


if __name__ == "__main__":
    key = jax.random.PRNGKey(0)
    k_x, k_w1, k_b1, k_w2, k_b2 = jax.random.split(key, 5)

    # Module config: input_shape = (input_dim,), hidden_count = 128 (default)
    batch = 16
    input_dim = 16
    hidden = 128
    out_dim = hidden // 4  # 32
    gain = 2.0 ** 0.5

    # PyTorch nn.Linear weight shape is [out, in]; orthogonal_ applied there.
    w1_torch = orthogonal(k_w1, (hidden, input_dim), gain=gain)   # [H, D_in]
    w2_torch = orthogonal(k_w2, (out_dim, hidden), gain=gain)     # [D_out, H]
    b1 = jax.random.uniform(k_b1, (hidden,), minval=-0.1, maxval=0.1)
    b2 = jax.random.uniform(k_b2, (out_dim,), minval=-0.1, maxval=0.1)

    # Kernel expects [in, out] layout.
    w1 = w1_torch.T
    w2 = w2_torch.T

    x = jax.random.normal(k_x, (batch, input_dim), dtype=jnp.float32)

    # 1) Full-f32 path: must match the plain-JAX f32 reference tightly
    #    (proves the module's forward semantics are preserved).
    params_f32 = prepare_params(w1, b1, w2, b2, compute_dtype=jnp.float32)
    out_f32 = jax.block_until_ready(mlp_forward(x, params_f32))
    ref_f32 = ref_forward(x, w1, b1, w2, b2, jnp.float32)
    assert out_f32.shape == (batch, out_dim)
    assert jnp.allclose(out_f32, ref_f32, atol=1e-4, rtol=1e-4)

    # 2) Default bf16-MXU path: compare against a reference using the same
    #    bf16-operand / f32-accumulate arithmetic.
    params_bf16 = prepare_params(w1, b1, w2, b2, compute_dtype=jnp.bfloat16)
    out_bf16 = jax.block_until_ready(mlp_forward(x, params_bf16))
    ref_bf16 = ref_forward(x, w1, b1, w2, b2, jnp.bfloat16)
    assert out_bf16.shape == (batch, out_dim)
    assert jnp.allclose(out_bf16, ref_bf16, atol=2e-3, rtol=2e-3)

    print("KERNEL_OK")
</pallas_src>

<mosaic_0001>
module attributes {stable_mosaic.version = 11 : i64} {
  func.func @mlp_kernel(%arg0: i32, %arg1: memref<16x128xf32, #tpu.memory_space<vmem>>, %arg2: memref<128x128xf32, #tpu.memory_space<vmem>>, %arg3: memref<1x128xf32, #tpu.memory_space<vmem>>, %arg4: memref<128x128xf32, #tpu.memory_space<vmem>>, %arg5: memref<1x128xf32, #tpu.memory_space<vmem>>, %arg6: memref<16x128xf32, #tpu.memory_space<vmem>>) attributes {dimension_semantics = [#tpu.dimension_semantics<parallel>], iteration_bounds = array<i64: 1>, scalar_prefetch = 0 : i64, scratch_operands = 0 : i64, tpu.core_type = #tpu.core_type<tc>, window_params = [{transform_indices = @transform_0, window_bounds = array<i64: 16, 128>}, {pipeline_mode = #tpu.pipeline_mode<synchronous>, transform_indices = @transform_1, window_bounds = array<i64: 128, 128>}, {pipeline_mode = #tpu.pipeline_mode<synchronous>, transform_indices = @transform_2, window_bounds = array<i64: 1, 128>}, {pipeline_mode = #tpu.pipeline_mode<synchronous>, transform_indices = @transform_3, window_bounds = array<i64: 128, 128>}, {pipeline_mode = #tpu.pipeline_mode<synchronous>, transform_indices = @transform_4, window_bounds = array<i64: 1, 128>}, {transform_indices = @transform_5, window_bounds = array<i64: 16, 128>}]} {
    %c0 = arith.constant 0 : index
    %c0_0 = arith.constant 0 : index
    %0 = vector.load %arg1[%c0, %c0_0] : memref<16x128xf32, #tpu.memory_space<vmem>>, vector<16x128xf32>
    %c0_1 = arith.constant 0 : index
    %c0_2 = arith.constant 0 : index
    %1 = vector.load %arg2[%c0_1, %c0_2] : memref<128x128xf32, #tpu.memory_space<vmem>>, vector<128x128xf32>
    %cst = arith.constant dense<0.000000e+00> : vector<16x128xf32>
    %2 = tpu.matmul %0, %1, %cst {dimension_numbers = #tpu.dot_dimension_numbers<[1], [0], [0], [1], [0, 0, 1, 1], [], []>} : vector<16x128xf32>, vector<128x128xf32>, vector<16x128xf32> -> vector<16x128xf32>
    %c0_3 = arith.constant 0 : index
    %c0_4 = arith.constant 0 : index
    %3 = vector.load %arg3[%c0_3, %c0_4] : memref<1x128xf32, #tpu.memory_space<vmem>>, vector<1x128xf32>
    %4 = vector.broadcast %3 : vector<1x128xf32> to vector<16x128xf32>
    %5 = arith.addf %2, %4 : vector<16x128xf32>
    %cst_5 = arith.constant 0.000000e+00 : f32
    %6 = vector.broadcast %cst_5 : f32 to vector<16x128xf32>
    %7 = arith.maximumf %5, %6 : vector<16x128xf32>
    %c0_6 = arith.constant 0 : index
    %c0_7 = arith.constant 0 : index
    %8 = vector.load %arg4[%c0_6, %c0_7] : memref<128x128xf32, #tpu.memory_space<vmem>>, vector<128x128xf32>
    %cst_8 = arith.constant dense<0.000000e+00> : vector<16x128xf32>
    %9 = tpu.matmul %7, %8, %cst_8 {dimension_numbers = #tpu.dot_dimension_numbers<[1], [0], [0], [1], [0, 0, 1, 1], [], []>} : vector<16x128xf32>, vector<128x128xf32>, vector<16x128xf32> -> vector<16x128xf32>
    %c0_9 = arith.constant 0 : index
    %c0_10 = arith.constant 0 : index
    %10 = vector.load %arg5[%c0_9, %c0_10] : memref<1x128xf32, #tpu.memory_space<vmem>>, vector<1x128xf32>
    %11 = vector.broadcast %10 : vector<1x128xf32> to vector<16x128xf32>
    %12 = arith.addf %9, %11 : vector<16x128xf32>
    %c0_11 = arith.constant 0 : index
    %c0_12 = arith.constant 0 : index
    %13 = vector.load %arg6[%c0_11, %c0_12] : memref<16x128xf32, #tpu.memory_space<vmem>>, vector<16x128xf32>
    tpu.vector_store %arg6[%c0_11, %c0_12], %12 {strides = array<i32>} : memref<16x128xf32, #tpu.memory_space<vmem>>, vector<16x128xf32>,
    return
  }
  func.func @transform_0(%arg0: i32) -> (i32, i32) {
    %c0_i32 = arith.constant 0 : i32
    %c0_i32_0 = arith.constant 0 : i32
    return %arg0, %c0_i32 : i32, i32
  }
  func.func @transform_1(%arg0: i32) -> (i32, i32) {
    %c0_i32 = arith.constant 0 : i32
    %c0_i32_0 = arith.constant 0 : i32
    %c0_i32_1 = arith.constant 0 : i32
    return %c0_i32, %c0_i32_0 : i32, i32
  }
  func.func @transform_2(%arg0: i32) -> (i32, i32) {
    %c0_i32 = arith.constant 0 : i32
    %c0_i32_0 = arith.constant 0 : i32
    %c0_i32_1 = arith.constant 0 : i32
    return %c0_i32, %c0_i32_0 : i32, i32
  }
  func.func @transform_3(%arg0: i32) -> (i32, i32) {
    %c0_i32 = arith.constant 0 : i32
    %c0_i32_0 = arith.constant 0 : i32
    %c0_i32_1 = arith.constant 0 : i32
    return %c0_i32, %c0_i32_0 : i32, i32
  }
  func.func @transform_4(%arg0: i32) -> (i32, i32) {
    %c0_i32 = arith.constant 0 : i32
    %c0_i32_0 = arith.constant 0 : i32
    %c0_i32_1 = arith.constant 0 : i32
    return %c0_i32, %c0_i32_0 : i32, i32
  }
  func.func @transform_5(%arg0: i32) -> (i32, i32) {
    %c0_i32 = arith.constant 0 : i32
    %c0_i32_0 = arith.constant 0 : i32
    return %arg0, %c0_i32 : i32, i32
  }
}

module attributes {stable_mosaic.version = 11 : i64} {
  func.func @mlp_kernel(%arg0: i32, %arg1: memref<16x128xf32, #tpu.memory_space<vmem>>, %arg2: memref<128x128xf32, #tpu.memory_space<vmem>>, %arg3: memref<1x128xf32, #tpu.memory_space<vmem>>, %arg4: memref<128x128xf32, #tpu.memory_space<vmem>>, %arg5: memref<1x128xf32, #tpu.memory_space<vmem>>, %arg6: memref<16x128xf32, #tpu.memory_space<vmem>>) attributes {dimension_semantics = [#tpu.dimension_semantics<parallel>], iteration_bounds = array<i64: 1>, scalar_prefetch = 0 : i64, scratch_operands = 0 : i64, tpu.core_type = #tpu.core_type<tc>, window_params = [{transform_indices = @transform_0, window_bounds = array<i64: 16, 128>}, {pipeline_mode = #tpu.pipeline_mode<synchronous>, transform_indices = @transform_1, window_bounds = array<i64: 128, 128>}, {pipeline_mode = #tpu.pipeline_mode<synchronous>, transform_indices = @transform_2, window_bounds = array<i64: 1, 128>}, {pipeline_mode = #tpu.pipeline_mode<synchronous>, transform_indices = @transform_3, window_bounds = array<i64: 128, 128>}, {pipeline_mode = #tpu.pipeline_mode<synchronous>, transform_indices = @transform_4, window_bounds = array<i64: 1, 128>}, {transform_indices = @transform_5, window_bounds = array<i64: 16, 128>}]} {
    %c0 = arith.constant 0 : index
    %c0_0 = arith.constant 0 : index
    %0 = vector.load %arg1[%c0, %c0_0] : memref<16x128xf32, #tpu.memory_space<vmem>>, vector<16x128xf32>
    %c0_1 = arith.constant 0 : index
    %c0_2 = arith.constant 0 : index
    %1 = vector.load %arg2[%c0_1, %c0_2] : memref<128x128xf32, #tpu.memory_space<vmem>>, vector<128x128xf32>
    %cst = arith.constant dense<0.000000e+00> : vector<16x128xf32>
    %2 = tpu.matmul %0, %1, %cst {dimension_numbers = #tpu.dot_dimension_numbers<[1], [0], [0], [1], [0, 0, 1, 1], [], []>} : vector<16x128xf32>, vector<128x128xf32>, vector<16x128xf32> -> vector<16x128xf32>
    %c0_3 = arith.constant 0 : index
    %c0_4 = arith.constant 0 : index
    %3 = vector.load %arg3[%c0_3, %c0_4] : memref<1x128xf32, #tpu.memory_space<vmem>>, vector<1x128xf32>
    %4 = vector.broadcast %3 : vector<1x128xf32> to vector<16x128xf32>
    %5 = arith.addf %2, %4 : vector<16x128xf32>
    %cst_5 = arith.constant 0.000000e+00 : f32
    %6 = vector.broadcast %cst_5 : f32 to vector<16x128xf32>
    %7 = arith.maximumf %5, %6 : vector<16x128xf32>
    %c0_6 = arith.constant 0 : index
    %c0_7 = arith.constant 0 : index
    %8 = vector.load %arg4[%c0_6, %c0_7] : memref<128x128xf32, #tpu.memory_space<vmem>>, vector<128x128xf32>
    %cst_8 = arith.constant dense<0.000000e+00> : vector<16x128xf32>
    %9 = tpu.matmul %7, %8, %cst_8 {dimension_numbers = #tpu.dot_dimension_numbers<[1], [0], [0], [1], [0, 0, 1, 1], [], []>} : vector<16x128xf32>, vector<128x128xf32>, vector<16x128xf32> -> vector<16x128xf32>
    %c0_9 = arith.constant 0 : index
    %c0_10 = arith.constant 0 : index
    %10 = vector.load %arg5[%c0_9, %c0_10] : memref<1x128xf32, #tpu.memory_space<vmem>>, vector<1x128xf32>
    %11 = vector.broadcast %10 : vector<1x128xf32> to vector<16x128xf32>
    %12 = arith.addf %9, %11 : vector<16x128xf32>
    %c0_11 = arith.constant 0 : index
    %c0_12 = arith.constant 0 : index
    %13 = vector.load %arg6[%c0_11, %c0_12] : memref<16x128xf32, #tpu.memory_space<vmem>>, vector<16x128xf32>
    tpu.vector_store %arg6[%c0_11, %c0_12], %12 {strides = array<i32>} : memref<16x128xf32, #tpu.memory_space<vmem>>, vector<16x128xf32>,
    return
  }
  func.func @transform_0(%arg0: i32) -> (i32, i32) {
    %c0_i32 = arith.constant 0 : i32
    %c0_i32_0 = arith.constant 0 : i32
    return %arg0, %c0_i32 : i32, i32
  }
  func.func @transform_1(%arg0: i32) -> (i32, i32) {
    %c0_i32 = arith.constant 0 : i32
    %c0_i32_0 = arith.constant 0 : i32
    %c0_i32_1 = arith.constant 0 : i32
    return %c0_i32, %c0_i32_0 : i32, i32
  }
  func.func @transform_2(%arg0: i32) -> (i32, i32) {
    %c0_i32 = arith.constant 0 : i32
    %c0_i32_0 = arith.constant 0 : i32
    %c0_i32_1 = arith.constant 0 : i32
    return %c0_i32, %c0_i32_0 : i32, i32
  }
  func.func @transform_3(%arg0: i32) -> (i32, i32) {
    %c0_i32 = arith.constant 0 : i32
    %c0_i32_0 = arith.constant 0 : i32
    %c0_i32_1 = arith.constant 0 : i32
    return %c0_i32, %c0_i32_0 : i32, i32
  }
  func.func @transform_4(%arg0: i32) -> (i32, i32) {
    %c0_i32 = arith.constant 0 : i32
    %c0_i32_0 = arith.constant 0 : i32
    %c0_i32_1 = arith.constant 0 : i32
    return %c0_i32, %c0_i32_0 : i32, i32
  }
  func.func @transform_5(%arg0: i32) -> (i32, i32) {
    %c0_i32 = arith.constant 0 : i32
    %c0_i32_0 = arith.constant 0 : i32
    return %arg0, %c0_i32 : i32, i32
  }
}

</mosaic_0001>

<llo_original>
// kernel: tpu_custom_call.1
$region0: #{tpu_custom_call.1}
  #allocation0 [shape = 'u32[]', space=smem, size = 0x4, offset = 0x4, fixed_abs, tag = 'smem constant byte address 0x4 - core index']
  #allocation1 [shape = 'u32[144,128]{1,0:T(1,128)}', space=vmem, size = 0x12000, scoped, tag = 'internal scratch']
  %s0 = inlined_call_operand.hbm [shape: f32[16,128], index: 0, kind: input, shape index: {}]
  %s1 = inlined_call_operand.hbm [shape: f32[128,128], index: 1, kind: input, shape index: {}]
  %s2 = inlined_call_operand.vmem [shape: f32[1,128], index: 2, kind: input, shape index: {}]
  %s3 = inlined_call_operand.hbm [shape: f32[128,128], index: 3, kind: input, shape index: {}]
  %s4 = inlined_call_operand.vmem [shape: f32[1,128], index: 4, kind: input, shape index: {}]
  %s5 = inlined_call_operand.hbm [shape: f32[16,128], index: 5, kind: output, shape index: {}]
  %s6 = sld [smem:[#allocation0]]
  $region42: #{tpu_custom_call.1} parent=0
    _
  %s8 = ssub.s32 1, %s6
  %s9 = scalar_select 0, %s8, %s6
  $region1: #{tpu_custom_call.1} parent=0
    #allocation2 [shape = 'u8[8192]{0}', space=vmem, size = 0x2000, scoped, tag = 'input window, operand 0, single buffered']
    #allocation3 [shape = 's32[1]{0}', space=sflag, size = 0x4, scoped, tag = 'scoped memory for tpu_custom_call.1']
    #allocation4 [shape = 's32[1]{0}', space=sflag, size = 0x4, scoped, tag = 'scoped memory for tpu_custom_call.1']
    #allocation5 [shape = 'u8[65536]{0}', space=vmem, size = 0x10000, scoped, tag = 'input window, operand 1, single buffered']
    #allocation6 [shape = 's32[1]{0}', space=sflag, size = 0x4, scoped, tag = 'scoped memory for tpu_custom_call.1']
    #allocation7 [shape = 'u8[65536]{0}', space=vmem, size = 0x10000, scoped, tag = 'input window, operand 3, single buffered']
    #allocation8 [shape = 'u8[8192]{0}', space=vmem, size = 0x2000, scoped, tag = 'output window, operand 0, single buffered']
    %10 = vsyncpa [#allocation3], 0
    %11 = vsyncpa [#allocation6], 0
    %12 = vsyncpa [#allocation4], 0
    // Predicated region
    $region2: #{tpu_custom_call.1} parent=1 // pred_check
      _
    $region3: #{tpu_custom_call.1} parent=1 // pred_check_branch
      %14 = sbr.rel (0) target = $region5
    $region4: #{tpu_custom_call.1} parent=1 // pred_region
      %s16 = ssub.s32 256, 256
      %17 = vsyncadd [#allocation3], %s16
      %s18 = sshll.u32 [#allocation2], 4
      %s19 = int_to_ptr.vmem [resolvable:$true] %s18
      %24 = dma.hbm_to_vmem [thread:$0]  %s0, 256, %s19, [#allocation3], 128, 128, 8
    $region5: #{tpu_custom_call.1} parent=1 // pred_fallthru
      _
    // Predicated region
    $region6: #{tpu_custom_call.1} parent=1 // pred_check
      _
    $region7: #{tpu_custom_call.1} parent=1 // pred_check_branch
      %26 = sbr.rel (0) target = $region9
    $region8: #{tpu_custom_call.1} parent=1 // pred_region
      %s28 = ssub.s32 2048, 2048
      %29 = vsyncadd [#allocation6], %s28
      %s30 = sshll.u32 [#allocation5], 4
      %s31 = int_to_ptr.vmem [resolvable:$true] %s30
      %36 = dma.hbm_to_vmem [thread:$0]  %s1, 2048, %s31, [#allocation6], 128, 128, 8
    $region9: #{tpu_custom_call.1} parent=1 // pred_fallthru
      _
    // Predicated region
    $region10: #{tpu_custom_call.1} parent=1 // pred_check
      _
    $region11: #{tpu_custom_call.1} parent=1 // pred_check_branch
      %38 = sbr.rel (0) target = $region13
    $region12: #{tpu_custom_call.1} parent=1 // pred_region
      _
    $region13: #{tpu_custom_call.1} parent=1 // pred_fallthru
      _
    // Predicated region
    $region14: #{tpu_custom_call.1} parent=1 // pred_check
      _
    $region15: #{tpu_custom_call.1} parent=1 // pred_check_branch
      %40 = sbr.rel (0) target = $region17
    $region16: #{tpu_custom_call.1} parent=1 // pred_region
      %s42 = ssub.s32 2048, 2048
      %43 = vsyncadd [#allocation6], %s42
      %s44 = sshll.u32 [#allocation7], 4
      %s45 = int_to_ptr.vmem [resolvable:$true] %s44
      %50 = dma.hbm_to_vmem [thread:$0]  %s3, 2048, %s45, [#allocation6], 128, 128, 8
    $region17: #{tpu_custom_call.1} parent=1 // pred_fallthru
      _
    // Predicated region
    $region18: #{tpu_custom_call.1} parent=1 // pred_check
      _
    $region19: #{tpu_custom_call.1} parent=1 // pred_check_branch
      %52 = sbr.rel (0) target = $region21
    $region20: #{tpu_custom_call.1} parent=1 // pred_region
      _
    $region21: #{tpu_custom_call.1} parent=1 // pred_fallthru
      _
    // Predicated region
    $region22: #{tpu_custom_call.1} parent=1 // pred_check
      _
    $region23: #{tpu_custom_call.1} parent=1 // pred_check_branch
      %54 = sbr.rel (0) target = $region25
    $region24: #{tpu_custom_call.1} parent=1 // pred_region
      %55 = dma.done [#allocation3], 256
    $region25: #{tpu_custom_call.1} parent=1 // pred_fallthru
      _
    // Predicated region
    $region26: #{tpu_custom_call.1} parent=1 // pred_check
      _
    $region27: #{tpu_custom_call.1} parent=1 // pred_check_branch
      %57 = sbr.rel (0) target = $region29
    $region28: #{tpu_custom_call.1} parent=1 // pred_region
      %58 = dma.done [#allocation6], 2048
    $region29: #{tpu_custom_call.1} parent=1 // pred_fallthru
      _
    // Predicated region
    $region30: #{tpu_custom_call.1} parent=1 // pred_check
      _
    $region31: #{tpu_custom_call.1} parent=1 // pred_check_branch
      %60 = sbr.rel (0) target = $region33
    $region32: #{tpu_custom_call.1} parent=1 // pred_region
      %61 = dma.done [#allocation6], 2048
    $region33: #{tpu_custom_call.1} parent=1 // pred_fallthru
      _
    %v62 = vld [vmem:[#allocation2] sm:$0xff]
    %v63 = vld [vmem:[#allocation2 + $0x8] sm:$0xff]
    %v64 = vld [vmem:[#allocation5] sm:$0xff]
    %v65 = vld [vmem:[#allocation5 + $0x8] sm:$0xff]
    %v66 = vld [vmem:[#allocation5 + $0x10] sm:$0xff]
    %v67 = vld [vmem:[#allocation5 + $0x18] sm:$0xff]
    %v68 = vld [vmem:[#allocation5 + $0x20] sm:$0xff]
    %v69 = vld [vmem:[#allocation5 + $0x28] sm:$0xff]
    %v70 = vld [vmem:[#allocation5 + $0x30] sm:$0xff]
    %v71 = vld [vmem:[#allocation5 + $0x38] sm:$0xff]
    %v72 = vld [vmem:[#allocation5 + $0x40] sm:$0xff]
    %v73 = vld [vmem:[#allocation5 + $0x48] sm:$0xff]
    %v74 = vld [vmem:[#allocation5 + $0x50] sm:$0xff]
    %v75 = vld [vmem:[#allocation5 + $0x58] sm:$0xff]
    %v76 = vld [vmem:[#allocation5 + $0x60] sm:$0xff]
    %v77 = vld [vmem:[#allocation5 + $0x68] sm:$0xff]
    %v78 = vld [vmem:[#allocation5 + $0x70] sm:$0xff]
    %v79 = vld [vmem:[#allocation5 + $0x78] sm:$0xff]
    %v80 = vld [vmem:[%s2] sm:$0x1]
    %v82 = vlaneseq
    %v83 = vshrl.u32 %v82, 7
    %v84 = vsub.s32 0, %v83
    %v85 = vrot.slane %v80, %v84
    %87 = vmatprep.subr.mxu0 0.0
    %88 = vmatpush1.msra.mxu0 %v64
    %89 = vmatprep.subr.mxu0 0.0
    %90 = vmatpush1.msra.mxu0 %v65
    %91 = vmatprep.subr.mxu0 0.0
    %92 = vmatpush1.msra.mxu0 %v66
    %93 = vmatprep.subr.mxu0 0.0
    %94 = vmatpush1.msra.mxu0 %v67
    %95 = vmatprep.subr.mxu0 0.0
    %96 = vmatpush1.msra.mxu0 %v68
    %97 = vmatprep.subr.mxu0 0.0
    %98 = vmatpush1.msra.mxu0 %v69
    %99 = vmatprep.subr.mxu0 0.0
    %100 = vmatpush1.msra.mxu0 %v70
    %101 = vmatprep.subr.mxu0 0.0
    %102 = vmatpush1.msra.mxu0 %v71
    %103 = vmatprep.subr.mxu0 0.0
    %104 = vmatpush1.msra.mxu0 %v72
    %105 = vmatprep.subr.mxu0 0.0
    %106 = vmatpush1.msra.mxu0 %v73
    %107 = vmatprep.subr.mxu0 0.0
    %108 = vmatpush1.msra.mxu0 %v74
    %109 = vmatprep.subr.mxu0 0.0
    %110 = vmatpush1.msra.mxu0 %v75
    %111 = vmatprep.subr.mxu0 0.0
    %112 = vmatpush1.msra.mxu0 %v76
    %113 = vmatprep.subr.mxu0 0.0
    %114 = vmatpush1.msra.mxu0 %v77
    %115 = vmatprep.subr.mxu0 0.0
    %116 = vmatpush1.msra.mxu0 %v78
    %117 = vmatprep.subr.mxu0 0.0
    %118 = vmatpush1.msra.mxu0 %v79
    %119 = vmatprep.subr.mxu0 0.0
    %120 = vmatpush1.msra.mxu0 0.0
    %121 = vmatprep.subr.mxu0 0.0
    %122 = vmatpush1.msra.mxu0 0.0
    %123 = vmatprep.subr.mxu0 0.0
    %124 = vmatpush1.msra.mxu0 0.0
    %125 = vmatprep.subr.mxu0 0.0
    %126 = vmatpush1.msra.mxu0 0.0
    %127 = vmatprep.subr.mxu0 0.0
    %128 = vmatpush1.msra.mxu0 0.0
    %129 = vmatprep.subr.mxu0 0.0
    %130 = vmatpush1.msra.mxu0 0.0
    %131 = vmatprep.subr.mxu0 0.0
    %132 = vmatpush1.msra.mxu0 0.0
    %133 = vmatprep.subr.mxu0 0.0
    %134 = vmatpush1.msra.mxu0 0.0
    %135 = vmatprep.subr.mxu0 0.0
    %136 = vmatpush1.msra.mxu0 0.0
    %137 = vmatprep.subr.mxu0 0.0
    %138 = vmatpush1.msra.mxu0 0.0
    %139 = vmatprep.subr.mxu0 0.0
    %140 = vmatpush1.msra.mxu0 0.0
    %141 = vmatprep.subr.mxu0 0.0
    %142 = vmatpush1.msra.mxu0 0.0
    %143 = vmatprep.subr.mxu0 0.0
    %144 = vmatpush1.msra.mxu0 0.0
    %145 = vmatprep.subr.mxu0 0.0
    %146 = vmatpush1.msra.mxu0 0.0
    %147 = vmatprep.subr.mxu0 0.0
    %148 = vmatpush1.msra.mxu0 0.0
    %149 = vmatprep.subr.mxu0 0.0
    %150 = vmatpush1.msra.mxu0 0.0
    %151 = vmatprep.mubr.f32.mxu0 0.0
    %152 = vmatmul.mubr.f32.gmra.mrb[0].mxu0 %v62
    %v153 = vpop.f32.mrb[0].mxu0
    %v154 = vadd.f32 %v85, %v153
    %v155 = vpop.f32.mrb[0].mxu0
    %156 = vmatprep.mubr.f32.mxu0 0.0
    %157 = vmatmul.mubr.f32.gmra.mrb[0].mxu0 %v63
    %v158 = vpop.f32.mrb[0].mxu0
    %v159 = vadd.f32 %v85, %v158
    %v160 = vpop.f32.mrb[0].mxu0
    %161 = vdwg.mxu0
    %v162 = vmax.f32 %v154, 0.0
    %v163 = vmax.f32 %v159, 0.0
    %v164 = vld [vmem:[#allocation7] sm:$0xff]
    %v165 = vld [vmem:[#allocation7 + $0x8] sm:$0xff]
    %v166 = vld [vmem:[#allocation7 + $0x10] sm:$0xff]
    %v167 = vld [vmem:[#allocation7 + $0x18] sm:$0xff]
    %v168 = vld [vmem:[#allocation7 + $0x20] sm:$0xff]
    %v169 = vld [vmem:[#allocation7 + $0x28] sm:$0xff]
    %v170 = vld [vmem:[#allocation7 + $0x30] sm:$0xff]
    %v171 = vld [vmem:[#allocation7 + $0x38] sm:$0xff]
    %v172 = vld [vmem:[#allocation7 + $0x40] sm:$0xff]
    %v173 = vld [vmem:[#allocation7 + $0x48] sm:$0xff]
    %v174 = vld [vmem:[#allocation7 + $0x50] sm:$0xff]
    %v175 = vld [vmem:[#allocation7 + $0x58] sm:$0xff]
    %v176 = vld [vmem:[#allocation7 + $0x60] sm:$0xff]
    %v177 = vld [vmem:[#allocation7 + $0x68] sm:$0xff]
    %v178 = vld [vmem:[#allocation7 + $0x70] sm:$0xff]
    %v179 = vld [vmem:[#allocation7 + $0x78] sm:$0xff]
    %v180 = vld [vmem:[%s4] sm:$0x1]
    %v182 = vlaneseq
    %v183 = vshrl.u32 %v182, 7
    %v184 = vsub.s32 0, %v183
    %v185 = vrot.slane %v180, %v184
    %187 = vmatprep.subr.mxu0 0.0
    %188 = vmatpush1.msra.mxu0 %v164
    %189 = vmatprep.subr.mxu0 0.0
    %190 = vmatpush1.msra.mxu0 %v165
    %191 = vmatprep.subr.mxu0 0.0
    %192 = vmatpush1.msra.mxu0 %v166
    %193 = vmatprep.subr.mxu0 0.0
    %194 = vmatpush1.msra.mxu0 %v167
    %195 = vmatprep.subr.mxu0 0.0
    %196 = vmatpush1.msra.mxu0 %v168
    %197 = vmatprep.subr.mxu0 0.0
    %198 = vmatpush1.msra.mxu0 %v169
    %199 = vmatprep.subr.mxu0 0.0
    %200 = vmatpush1.msra.mxu0 %v170
    %201 = vmatprep.subr.mxu0 0.0
    %202 = vmatpush1.msra.mxu0 %v171
    %203 = vmatprep.subr.mxu0 0.0
    %204 = vmatpush1.msra.mxu0 %v172
    %205 = vmatprep.subr.mxu0 0.0
    %206 = vmatpush1.msra.mxu0 %v173
    %207 = vmatprep.subr.mxu0 0.0
    %208 = vmatpush1.msra.mxu0 %v174
    %209 = vmatprep.subr.mxu0 0.0
    %210 = vmatpush1.msra.mxu0 %v175
    %211 = vmatprep.subr.mxu0 0.0
    %212 = vmatpush1.msra.mxu0 %v176
    %213 = vmatprep.subr.mxu0 0.0
    %214 = vmatpush1.msra.mxu0 %v177
    %215 = vmatprep.subr.mxu0 0.0
    %216 = vmatpush1.msra.mxu0 %v178
    %217 = vmatprep.subr.mxu0 0.0
    %218 = vmatpush1.msra.mxu0 %v179
    %219 = vmatprep.subr.mxu0 0.0
    %220 = vmatpush1.msra.mxu0 0.0
    %221 = vmatprep.subr.mxu0 0.0
    %222 = vmatpush1.msra.mxu0 0.0
    %223 = vmatprep.subr.mxu0 0.0
    %224 = vmatpush1.msra.mxu0 0.0
    %225 = vmatprep.subr.mxu0 0.0
    %226 = vmatpush1.msra.mxu0 0.0
    %227 = vmatprep.subr.mxu0 0.0
    %228 = vmatpush1.msra.mxu0 0.0
    %229 = vmatprep.subr.mxu0 0.0
    %230 = vmatpush1.msra.mxu0 0.0
    %231 = vmatprep.subr.mxu0 0.0
    %232 = vmatpush1.msra.mxu0 0.0
    %233 = vmatprep.subr.mxu0 0.0
    %234 = vmatpush1.msra.mxu0 0.0
    %235 = vmatprep.subr.mxu0 0.0
    %236 = vmatpush1.msra.mxu0 0.0
    %237 = vmatprep.subr.mxu0 0.0
    %238 = vmatpush1.msra.mxu0 0.0
    %239 = vmatprep.subr.mxu0 0.0
    %240 = vmatpush1.msra.mxu0 0.0
    %241 = vmatprep.subr.mxu0 0.0
    %242 = vmatpush1.msra.mxu0 0.0
    %243 = vmatprep.subr.mxu0 0.0
    %244 = vmatpush1.msra.mxu0 0.0
    %245 = vmatprep.subr.mxu0 0.0
    %246 = vmatpush1.msra.mxu0 0.0
    %247 = vmatprep.subr.mxu0 0.0
    %248 = vmatpush1.msra.mxu0 0.0
    %249 = vmatprep.subr.mxu0 0.0
    %250 = vmatpush1.msra.mxu0 0.0
    %251 = vmatprep.mubr.f32.mxu0 0.0
    %252 = vmatmul.mubr.f32.gmra.mrb[0].mxu0 %v162
    %v253 = vpop.f32.mrb[0].mxu0
    %v254 = vadd.f32 %v185, %v253
    %v255 = vpop.f32.mrb[0].mxu0
    %256 = vmatprep.mubr.f32.mxu0 0.0
    %257 = vmatmul.mubr.f32.gmra.mrb[0].mxu0 %v163
    %v258 = vpop.f32.mrb[0].mxu0
    %v259 = vadd.f32 %v185, %v258
    %v260 = vpop.f32.mrb[0].mxu0
    %261 = vdwg.mxu0
    %262 = vst [vmem:[#allocation8] sm:$0xff] %v254
    %263 = vst [vmem:[#allocation8 + $0x8] sm:$0xff] %v259
    // Predicated region
    $region34: #{tpu_custom_call.1} parent=1 // pred_check
      _
    $region35: #{tpu_custom_call.1} parent=1 // pred_check_branch
      %265 = sbr.rel (0) target = $region37
    $region36: #{tpu_custom_call.1} parent=1 // pred_region
      %s267 = ssub.s32 256, 256
      %268 = vsyncadd [#allocation4], %s267
      %s269 = sshll.u32 [#allocation8], 4
      %s270 = int_to_ptr.vmem [resolvable:$true] %s269
      %275 = dma.vmem_to_hbm [thread:$0]  %s270, 256, %s5, [#allocation4], 128, 128, 8
    $region37: #{tpu_custom_call.1} parent=1 // pred_fallthru
      _
    // Predicated region
    $region38: #{tpu_custom_call.1} parent=1 // pred_check
      _
    $region39: #{tpu_custom_call.1} parent=1 // pred_check_branch
      %277 = sbr.rel (0) target = $region41
    $region40: #{tpu_custom_call.1} parent=1 // pred_region
      %278 = dma.done [#allocation4], 256
    $region41: #{tpu_custom_call.1} parent=1 // pred_fallthru
      _
    %279 = vsyncpa [#allocation3], 1
    %280 = vsyncpa [#allocation6], 1
    %281 = vsyncpa [#allocation4], 1

// kernel: tpu_custom_call.1
$region0: #{tpu_custom_call.1}
  #allocation0 [shape = 'u32[]', space=smem, size = 0x4, offset = 0x4, fixed_abs, tag = 'smem constant byte address 0x4 - core index']
  #allocation1 [shape = 'u32[144,128]{1,0:T(1,128)}', space=vmem, size = 0x12000, scoped, tag = 'internal scratch']
  %s0 = inlined_call_operand.hbm [shape: f32[16,128], index: 0, kind: input, shape index: {}]
  %s1 = inlined_call_operand.hbm [shape: f32[128,128], index: 1, kind: input, shape index: {}]
  %s2 = inlined_call_operand.vmem [shape: f32[1,128], index: 2, kind: input, shape index: {}]
  %s3 = inlined_call_operand.hbm [shape: f32[128,128], index: 3, kind: input, shape index: {}]
  %s4 = inlined_call_operand.vmem [shape: f32[1,128], index: 4, kind: input, shape index: {}]
  %s5 = inlined_call_operand.hbm [shape: f32[16,128], index: 5, kind: output, shape index: {}]
  %s6 = sld [smem:[#allocation0]]
  $region42: #{tpu_custom_call.1} parent=0
    _
  %s8 = ssub.s32 1, %s6
  %s9 = scalar_select 0, %s8, %s6
  $region1: #{tpu_custom_call.1} parent=0
    #allocation2 [shape = 'u8[8192]{0}', space=vmem, size = 0x2000, scoped, tag = 'input window, operand 0, single buffered']
    #allocation3 [shape = 's32[1]{0}', space=sflag, size = 0x4, scoped, tag = 'scoped memory for tpu_custom_call.1']
    #allocation4 [shape = 's32[1]{0}', space=sflag, size = 0x4, scoped, tag = 'scoped memory for tpu_custom_call.1']
    #allocation5 [shape = 'u8[65536]{0}', space=vmem, size = 0x10000, scoped, tag = 'input window, operand 1, single buffered']
    #allocation6 [shape = 's32[1]{0}', space=sflag, size = 0x4, scoped, tag = 'scoped memory for tpu_custom_call.1']
    #allocation7 [shape = 'u8[65536]{0}', space=vmem, size = 0x10000, scoped, tag = 'input window, operand 3, single buffered']
    #allocation8 [shape = 'u8[8192]{0}', space=vmem, size = 0x2000, scoped, tag = 'output window, operand 0, single buffered']
    %10 = vsyncpa [#allocation3], 0
    %11 = vsyncpa [#allocation6], 0
    %12 = vsyncpa [#allocation4], 0
    // Predicated region
    $region2: #{tpu_custom_call.1} parent=1 // pred_check
      _
    $region3: #{tpu_custom_call.1} parent=1 // pred_check_branch
      %14 = sbr.rel (0) target = $region5
    $region4: #{tpu_custom_call.1} parent=1 // pred_region
      %s16 = ssub.s32 256, 256
      %17 = vsyncadd [#allocation3], %s16
      %s18 = sshll.u32 [#allocation2], 4
      %s19 = int_to_ptr.vmem [resolvable:$true] %s18
      %24 = dma.hbm_to_vmem [thread:$0]  %s0, 256, %s19, [#allocation3], 128, 128, 8
    $region5: #{tpu_custom_call.1} parent=1 // pred_fallthru
      _
    // Predicated region
    $region6: #{tpu_custom_call.1} parent=1 // pred_check
      _
    $region7: #{tpu_custom_call.1} parent=1 // pred_check_branch
      %26 = sbr.rel (0) target = $region9
    $region8: #{tpu_custom_call.1} parent=1 // pred_region
      %s28 = ssub.s32 2048, 2048
      %29 = vsyncadd [#allocation6], %s28
      %s30 = sshll.u32 [#allocation5], 4
      %s31 = int_to_ptr.vmem [resolvable:$true] %s30
      %36 = dma.hbm_to_vmem [thread:$0]  %s1, 2048, %s31, [#allocation6], 128, 128, 8
    $region9: #{tpu_custom_call.1} parent=1 // pred_fallthru
      _
    // Predicated region
    $region10: #{tpu_custom_call.1} parent=1 // pred_check
      _
    $region11: #{tpu_custom_call.1} parent=1 // pred_check_branch
      %38 = sbr.rel (0) target = $region13
    $region12: #{tpu_custom_call.1} parent=1 // pred_region
      _
    $region13: #{tpu_custom_call.1} parent=1 // pred_fallthru
      _
    // Predicated region
    $region14: #{tpu_custom_call.1} parent=1 // pred_check
      _
    $region15: #{tpu_custom_call.1} parent=1 // pred_check_branch
      %40 = sbr.rel (0) target = $region17
    $region16: #{tpu_custom_call.1} parent=1 // pred_region
      %s42 = ssub.s32 2048, 2048
      %43 = vsyncadd [#allocation6], %s42
      %s44 = sshll.u32 [#allocation7], 4
      %s45 = int_to_ptr.vmem [resolvable:$true] %s44
      %50 = dma.hbm_to_vmem [thread:$0]  %s3, 2048, %s45, [#allocation6], 128, 128, 8
    $region17: #{tpu_custom_call.1} parent=1 // pred_fallthru
      _
    // Predicated region
    $region18: #{tpu_custom_call.1} parent=1 // pred_check
      _
    $region19: #{tpu_custom_call.1} parent=1 // pred_check_branch
      %52 = sbr.rel (0) target = $region21
    $region20: #{tpu_custom_call.1} parent=1 // pred_region
      _
    $region21: #{tpu_custom_call.1} parent=1 // pred_fallthru
      _
    // Predicated region
    $region22: #{tpu_custom_call.1} parent=1 // pred_check
      _
    $region23: #{tpu_custom_call.1} parent=1 // pred_check_branch
      %54 = sbr.rel (0) target = $region25
    $region24: #{tpu_custom_call.1} parent=1 // pred_region
      %55 = dma.done [#allocation3], 256
    $region25: #{tpu_custom_call.1} parent=1 // pred_fallthru
      _
    // Predicated region
    $region26: #{tpu_custom_call.1} parent=1 // pred_check
      _
    $region27: #{tpu_custom_call.1} parent=1 // pred_check_branch
      %57 = sbr.rel (0) target = $region29
    $region28: #{tpu_custom_call.1} parent=1 // pred_region
      %58 = dma.done [#allocation6], 2048
    $region29: #{tpu_custom_call.1} parent=1 // pred_fallthru
      _
    // Predicated region
    $region30: #{tpu_custom_call.1} parent=1 // pred_check
      _
    $region31: #{tpu_custom_call.1} parent=1 // pred_check_branch
      %60 = sbr.rel (0) target = $region33
    $region32: #{tpu_custom_call.1} parent=1 // pred_region
      %61 = dma.done [#allocation6], 2048
    $region33: #{tpu_custom_call.1} parent=1 // pred_fallthru
      _
    %v62 = vld [vmem:[#allocation2] sm:$0xff]
    %v63 = vld [vmem:[#allocation2 + $0x8] sm:$0xff]
    %v64 = vld [vmem:[#allocation5] sm:$0xff]
    %v65 = vld [vmem:[#allocation5 + $0x8] sm:$0xff]
    %v66 = vld [vmem:[#allocation5 + $0x10] sm:$0xff]
    %v67 = vld [vmem:[#allocation5 + $0x18] sm:$0xff]
    %v68 = vld [vmem:[#allocation5 + $0x20] sm:$0xff]
    %v69 = vld [vmem:[#allocation5 + $0x28] sm:$0xff]
    %v70 = vld [vmem:[#allocation5 + $0x30] sm:$0xff]
    %v71 = vld [vmem:[#allocation5 + $0x38] sm:$0xff]
    %v72 = vld [vmem:[#allocation5 + $0x40] sm:$0xff]
    %v73 = vld [vmem:[#allocation5 + $0x48] sm:$0xff]
    %v74 = vld [vmem:[#allocation5 + $0x50] sm:$0xff]
    %v75 = vld [vmem:[#allocation5 + $0x58] sm:$0xff]
    %v76 = vld [vmem:[#allocation5 + $0x60] sm:$0xff]
    %v77 = vld [vmem:[#allocation5 + $0x68] sm:$0xff]
    %v78 = vld [vmem:[#allocation5 + $0x70] sm:$0xff]
    %v79 = vld [vmem:[#allocation5 + $0x78] sm:$0xff]
    %v80 = vld [vmem:[%s2] sm:$0x1]
    %v82 = vlaneseq
    %v83 = vshrl.u32 %v82, 7
    %v84 = vsub.s32 0, %v83
    %v85 = vrot.slane %v80, %v84
    %87 = vmatprep.subr.mxu0 0.0
    %88 = vmatpush1.msra.mxu0 %v64
    %89 = vmatprep.subr.mxu0 0.0
    %90 = vmatpush1.msra.mxu0 %v65
    %91 = vmatprep.subr.mxu0 0.0
    %92 = vmatpush1.msra.mxu0 %v66
    %93 = vmatprep.subr.mxu0 0.0
    %94 = vmatpush1.msra.mxu0 %v67
    %95 = vmatprep.subr.mxu0 0.0
    %96 = vmatpush1.msra.mxu0 %v68
    %97 = vmatprep.subr.mxu0 0.0
    %98 = vmatpush1.msra.mxu0 %v69
    %99 = vmatprep.subr.mxu0 0.0
    %100 = vmatpush1.msra.mxu0 %v70
    %101 = vmatprep.subr.mxu0 0.0
    %102 = vmatpush1.msra.mxu0 %v71
    %103 = vmatprep.subr.mxu0 0.0
    %104 = vmatpush1.msra.mxu0 %v72
    %105 = vmatprep.subr.mxu0 0.0
    %106 = vmatpush1.msra.mxu0 %v73
    %107 = vmatprep.subr.mxu0 0.0
    %108 = vmatpush1.msra.mxu0 %v74
    %109 = vmatprep.subr.mxu0 0.0
    %110 = vmatpush1.msra.mxu0 %v75
    %111 = vmatprep.subr.mxu0 0.0
    %112 = vmatpush1.msra.mxu0 %v76
    %113 = vmatprep.subr.mxu0 0.0
    %114 = vmatpush1.msra.mxu0 %v77
    %115 = vmatprep.subr.mxu0 0.0
    %116 = vmatpush1.msra.mxu0 %v78
    %117 = vmatprep.subr.mxu0 0.0
    %118 = vmatpush1.msra.mxu0 %v79
    %119 = vmatprep.subr.mxu0 0.0
    %120 = vmatpush1.msra.mxu0 0.0
    %121 = vmatprep.subr.mxu0 0.0
    %122 = vmatpush1.msra.mxu0 0.0
    %123 = vmatprep.subr.mxu0 0.0
    %124 = vmatpush1.msra.mxu0 0.0
    %125 = vmatprep.subr.mxu0 0.0
    %126 = vmatpush1.msra.mxu0 0.0
    %127 = vmatprep.subr.mxu0 0.0
    %128 = vmatpush1.msra.mxu0 0.0
    %129 = vmatprep.subr.mxu0 0.0
    %130 = vmatpush1.msra.mxu0 0.0
    %131 = vmatprep.subr.mxu0 0.0
    %132 = vmatpush1.msra.mxu0 0.0
    %133 = vmatprep.subr.mxu0 0.0
    %134 = vmatpush1.msra.mxu0 0.0
    %135 = vmatprep.subr.mxu0 0.0
    %136 = vmatpush1.msra.mxu0 0.0
    %137 = vmatprep.subr.mxu0 0.0
    %138 = vmatpush1.msra.mxu0 0.0
    %139 = vmatprep.subr.mxu0 0.0
    %140 = vmatpush1.msra.mxu0 0.0
    %141 = vmatprep.subr.mxu0 0.0
    %142 = vmatpush1.msra.mxu0 0.0
    %143 = vmatprep.subr.mxu0 0.0
    %144 = vmatpush1.msra.mxu0 0.0
    %145 = vmatprep.subr.mxu0 0.0
    %146 = vmatpush1.msra.mxu0 0.0
    %147 = vmatprep.subr.mxu0 0.0
    %148 = vmatpush1.msra.mxu0 0.0
    %149 = vmatprep.subr.mxu0 0.0
    %150 = vmatpush1.msra.mxu0 0.0
    %151 = vmatprep.mubr.f32.mxu0 0.0
    %152 = vmatmul.mubr.f32.gmra.mrb[0].mxu0 %v62
    %v153 = vpop.f32.mrb[0].mxu0
    %v154 = vadd.f32 %v85, %v153
    %v155 = vpop.f32.mrb[0].mxu0
    %156 = vmatprep.mubr.f32.mxu0 0.0
    %157 = vmatmul.mubr.f32.gmra.mrb[0].mxu0 %v63
    %v158 = vpop.f32.mrb[0].mxu0
    %v159 = vadd.f32 %v85, %v158
    %v160 = vpop.f32.mrb[0].mxu0
    %161 = vdwg.mxu0
    %v162 = vmax.f32 %v154, 0.0
    %v163 = vmax.f32 %v159, 0.0
    %v164 = vld [vmem:[#allocation7] sm:$0xff]
    %v165 = vld [vmem:[#allocation7 + $0x8] sm:$0xff]
    %v166 = vld [vmem:[#allocation7 + $0x10] sm:$0xff]
    %v167 = vld [vmem:[#allocation7 + $0x18] sm:$0xff]
    %v168 = vld [vmem:[#allocation7 + $0x20] sm:$0xff]
    %v169 = vld [vmem:[#allocation7 + $0x28] sm:$0xff]
    %v170 = vld [vmem:[#allocation7 + $0x30] sm:$0xff]
    %v171 = vld [vmem:[#allocation7 + $0x38] sm:$0xff]
    %v172 = vld [vmem:[#allocation7 + $0x40] sm:$0xff]
    %v173 = vld [vmem:[#allocation7 + $0x48] sm:$0xff]
    %v174 = vld [vmem:[#allocation7 + $0x50] sm:$0xff]
    %v175 = vld [vmem:[#allocation7 + $0x58] sm:$0xff]
    %v176 = vld [vmem:[#allocation7 + $0x60] sm:$0xff]
    %v177 = vld [vmem:[#allocation7 + $0x68] sm:$0xff]
    %v178 = vld [vmem:[#allocation7 + $0x70] sm:$0xff]
    %v179 = vld [vmem:[#allocation7 + $0x78] sm:$0xff]
    %v180 = vld [vmem:[%s4] sm:$0x1]
    %v182 = vlaneseq
    %v183 = vshrl.u32 %v182, 7
    %v184 = vsub.s32 0, %v183
    %v185 = vrot.slane %v180, %v184
    %187 = vmatprep.subr.mxu0 0.0
    %188 = vmatpush1.msra.mxu0 %v164
    %189 = vmatprep.subr.mxu0 0.0
    %190 = vmatpush1.msra.mxu0 %v165
    %191 = vmatprep.subr.mxu0 0.0
    %192 = vmatpush1.msra.mxu0 %v166
    %193 = vmatprep.subr.mxu0 0.0
    %194 = vmatpush1.msra.mxu0 %v167
    %195 = vmatprep.subr.mxu0 0.0
    %196 = vmatpush1.msra.mxu0 %v168
    %197 = vmatprep.subr.mxu0 0.0
    %198 = vmatpush1.msra.mxu0 %v169
    %199 = vmatprep.subr.mxu0 0.0
    %200 = vmatpush1.msra.mxu0 %v170
    %201 = vmatprep.subr.mxu0 0.0
    %202 = vmatpush1.msra.mxu0 %v171
    %203 = vmatprep.subr.mxu0 0.0
    %204 = vmatpush1.msra.mxu0 %v172
    %205 = vmatprep.subr.mxu0 0.0
    %206 = vmatpush1.msra.mxu0 %v173
    %207 = vmatprep.subr.mxu0 0.0
    %208 = vmatpush1.msra.mxu0 %v174
    %209 = vmatprep.subr.mxu0 0.0
    %210 = vmatpush1.msra.mxu0 %v175
    %211 = vmatprep.subr.mxu0 0.0
    %212 = vmatpush1.msra.mxu0 %v176
    %213 = vmatprep.subr.mxu0 0.0
    %214 = vmatpush1.msra.mxu0 %v177
    %215 = vmatprep.subr.mxu0 0.0
    %216 = vmatpush1.msra.mxu0 %v178
    %217 = vmatprep.subr.mxu0 0.0
    %218 = vmatpush1.msra.mxu0 %v179
    %219 = vmatprep.subr.mxu0 0.0
    %220 = vmatpush1.msra.mxu0 0.0
    %221 = vmatprep.subr.mxu0 0.0
    %222 = vmatpush1.msra.mxu0 0.0
    %223 = vmatprep.subr.mxu0 0.0
    %224 = vmatpush1.msra.mxu0 0.0
    %225 = vmatprep.subr.mxu0 0.0
    %226 = vmatpush1.msra.mxu0 0.0
    %227 = vmatprep.subr.mxu0 0.0
    %228 = vmatpush1.msra.mxu0 0.0
    %229 = vmatprep.subr.mxu0 0.0
    %230 = vmatpush1.msra.mxu0 0.0
    %231 = vmatprep.subr.mxu0 0.0
    %232 = vmatpush1.msra.mxu0 0.0
    %233 = vmatprep.subr.mxu0 0.0
    %234 = vmatpush1.msra.mxu0 0.0
    %235 = vmatprep.subr.mxu0 0.0
    %236 = vmatpush1.msra.mxu0 0.0
    %237 = vmatprep.subr.mxu0 0.0
    %238 = vmatpush1.msra.mxu0 0.0
    %239 = vmatprep.subr.mxu0 0.0
    %240 = vmatpush1.msra.mxu0 0.0
    %241 = vmatprep.subr.mxu0 0.0
    %242 = vmatpush1.msra.mxu0 0.0
    %243 = vmatprep.subr.mxu0 0.0
    %244 = vmatpush1.msra.mxu0 0.0
    %245 = vmatprep.subr.mxu0 0.0
    %246 = vmatpush1.msra.mxu0 0.0
    %247 = vmatprep.subr.mxu0 0.0
    %248 = vmatpush1.msra.mxu0 0.0
    %249 = vmatprep.subr.mxu0 0.0
    %250 = vmatpush1.msra.mxu0 0.0
    %251 = vmatprep.mubr.f32.mxu0 0.0
    %252 = vmatmul.mubr.f32.gmra.mrb[0].mxu0 %v162
    %v253 = vpop.f32.mrb[0].mxu0
    %v254 = vadd.f32 %v185, %v253
    %v255 = vpop.f32.mrb[0].mxu0
    %256 = vmatprep.mubr.f32.mxu0 0.0
    %257 = vmatmul.mubr.f32.gmra.mrb[0].mxu0 %v163
    %v258 = vpop.f32.mrb[0].mxu0
    %v259 = vadd.f32 %v185, %v258
    %v260 = vpop.f32.mrb[0].mxu0
    %261 = vdwg.mxu0
    %262 = vst [vmem:[#allocation8] sm:$0xff] %v254
    %263 = vst [vmem:[#allocation8 + $0x8] sm:$0xff] %v259
    // Predicated region
    $region34: #{tpu_custom_call.1} parent=1 // pred_check
      _
    $region35: #{tpu_custom_call.1} parent=1 // pred_check_branch
      %265 = sbr.rel (0) target = $region37
    $region36: #{tpu_custom_call.1} parent=1 // pred_region
      %s267 = ssub.s32 256, 256
      %268 = vsyncadd [#allocation4], %s267
      %s269 = sshll.u32 [#allocation8], 4
      %s270 = int_to_ptr.vmem [resolvable:$true] %s269
      %275 = dma.vmem_to_hbm [thread:$0]  %s270, 256, %s5, [#allocation4], 128, 128, 8
    $region37: #{tpu_custom_call.1} parent=1 // pred_fallthru
      _
    // Predicated region
    $region38: #{tpu_custom_call.1} parent=1 // pred_check
      _
    $region39: #{tpu_custom_call.1} parent=1 // pred_check_branch
      %277 = sbr.rel (0) target = $region41
    $region40: #{tpu_custom_call.1} parent=1 // pred_region
      %278 = dma.done [#allocation4], 256
    $region41: #{tpu_custom_call.1} parent=1 // pred_fallthru
      _
    %279 = vsyncpa [#allocation3], 1
    %280 = vsyncpa [#allocation6], 1
    %281 = vsyncpa [#allocation4], 1

</llo_original>
